<compile_context>
chip_gen: v7x
topology: tpu7x:2x2x1
jax: 0.10.0
libtpu: 0.0.40
codegen_flags: <defaults>
</compile_context>

<pallas_src>
import math
import functools

import jax
import jax.numpy as jnp
from jax.experimental import pallas as pl
from jax.experimental.pallas import tpu as pltpu


# ---------------------------------------------------------------------------
# Kernel
# ---------------------------------------------------------------------------
def _attention_heads(Q, K, V, *, h, d_k, approx_recip):
    """Per-token attention over the h head slots ((rows, h, h) score semantics).

    All math is f32 and 2-D (minor dim = lanes) so it lowers cleanly for any
    d_k.  Softmax is batched per query head: ONE max / exp / sum / reciprocal
    over the lane-dense (rows, h) score block instead of h separate columns.
    """
    scale = 1.0 / math.sqrt(d_k)
    Qs = Q * scale                                           # hoisted: 1 mul, not h*h
    qh = [Qs[:, i * d_k:(i + 1) * d_k] for i in range(h)]
    kh = [K[:, j * d_k:(j + 1) * d_k] for j in range(h)]
    vh = [V[:, j * d_k:(j + 1) * d_k] for j in range(h)]

    outs = []
    for i in range(h):
        # Scores of query head i against all h key-head slots of the same token.
        s = jnp.concatenate(
            [jnp.sum(qh[i] * kh[j], axis=-1, keepdims=True) for j in range(h)],
            axis=-1)                                          # (rows, h) lane-dense
        m = jnp.max(s, axis=-1, keepdims=True)                # 1 max
        e = jnp.exp(s - m)                                    # 1 exp (EUP)
        l = jnp.sum(e, axis=-1, keepdims=True)                # 1 sum
        if approx_recip:
            p = e * pl.reciprocal(l, approx=True)             # EUP slot, frees VPU
        else:
            p = e / l                                         # exact (f32 parity path)
        acc = p[:, 0:1] * vh[0]
        for j in range(1, h):
            acc = acc + p[:, j:j + 1] * vh[j]
        outs.append(acc)
    # Assemble the full (rows, D) tile once -> single lane-dense store by caller.
    return jnp.concatenate(outs, axis=-1)


def _mha_kernel(*refs, h, d_k, self_attention, mm_dtype, approx_recip):
    D = h * d_k
    if self_attention:
        x_ref, w_ref, b_ref, o_ref = refs
        # One fused (tm, D) @ (D, 3D) MXU matmul for Q, K and V.  The cast to the
        # matmul dtype happens IN-KERNEL (hides under the MXU) so the HBM input
        # stream is a single f32 pass.
        x = x_ref[...].astype(mm_dtype)
        qkv = jnp.dot(x, w_ref[...],
                      preferred_element_type=jnp.float32) + b_ref[...]
        Q, K, V = qkv[:, :D], qkv[:, D:2 * D], qkv[:, 2 * D:]
    else:
        xq_ref, xk_ref, xv_ref, w_ref, b_ref, o_ref = refs

        def proj(xr, idx):
            w = w_ref[:, idx * D:(idx + 1) * D]
            b = b_ref[:, idx * D:(idx + 1) * D]
            return jnp.dot(xr[...].astype(mm_dtype), w,
                           preferred_element_type=jnp.float32) + b

        Q, K, V = proj(xq_ref, 0), proj(xk_ref, 1), proj(xv_ref, 2)

    o_ref[...] = _attention_heads(Q, K, V, h=h, d_k=d_k,
                                  approx_recip=approx_recip).astype(o_ref.dtype)


# ---------------------------------------------------------------------------
# Wrapper
# ---------------------------------------------------------------------------
def _round_up(x, m):
    return (x + m - 1) // m * m


def _device_is_v7():
    try:
        kind = jax.devices()[0].device_kind.lower()
    except Exception:
        kind = ""
    return ("v7" in kind) or ("7x" in kind)


def _choose_tm(n_rows, *, is_v7):
    """Row tile: multiple of 8 (f32 sublane); target >=4 grid steps so both v7x
    TensorCores get >=2 steps each and DMA/compute pipeline; 128-row aligned
    (full MXU passes) when large; capped by the per-generation VMEM budget."""
    n8 = _round_up(max(n_rows, 1), 8)
    cap = 512 if is_v7 else 1024            # v7x: 64 MiB VMEM, v5e/v6e: 128 MiB
    tm = min(cap, n8)
    if n8 > 8:
        tm = min(tm, max(8, _round_up(pl.cdiv(n8, 4), 8)))
    if tm >= 128:
        tm = (tm // 128) * 128
    return max(8, tm)


def multi_head_attention(query, key, value, params, *, h, tm=None,
                         use_bf16_matmul=True):
    """query/key/value: (B, S, d_model) f32.  Returns (B, S, d_model) f32."""
    B, S, D = query.shape
    assert D % h == 0
    d_k = D // h
    N = B * S

    wqkv, bqkv = params                  # wqkv: (D, 3D) pre-transposed, bqkv: (1, 3D)
    # Perf-only dispatch (both paths are correct); equal-but-distinct q/k/v arrays
    # take the 3-matmul path.
    self_attention = (key is query) and (value is query)

    is_v7 = _device_is_v7()
    if tm is None:
        tm = _choose_tm(N, is_v7=is_v7)
    tm = max(8, _round_up(min(tm, _round_up(N, 8)), 8))
    grid = (pl.cdiv(N, tm),)             # ragged last block is masked by Pallas

    # bf16 only on the MXU operands (f32 accumulation); softmax / per-head math
    # stays f32 (v5e has no bf16 VPU/EUP).
    mm_dtype = jnp.bfloat16 if use_bf16_matmul else jnp.float32
    mm_bytes = jnp.dtype(mm_dtype).itemsize
    w = wqkv.astype(mm_dtype)
    b = bqkv.astype(jnp.float32)

    n_x = 1 if self_attention else 3
    xs = ([query.reshape(N, D)] if self_attention else
          [query.reshape(N, D), key.reshape(N, D), value.reshape(N, D)])

    # Triple-buffer the streamed inputs when D is small (matmul per step is tiny
    # vs. DMA latency); otherwise default double-buffering.
    x_buffers = 3 if D <= 256 else 2

    # VMEM budget: single-buffered resident weights + bias, multi-buffered f32
    # inputs/outputs, QKV + attention intermediates, 2x slack.  Floor at the
    # 32 MiB scoped default, cap below the physical per-generation VMEM.
    need = (D * 3 * D * mm_bytes + 3 * D * 4
            + n_x * x_buffers * tm * D * 4
            + 2 * tm * D * 4
            + 8 * tm * 3 * D * 4)
    cap_bytes = (48 if is_v7 else 96) * 1024 * 1024
    vmem_limit = int(min(cap_bytes, max(32 * 1024 * 1024, 2 * need)))

    cost = pl.CostEstimate(
        flops=int(2 * N * D * 3 * D + 4 * N * h * h * d_k),
        transcendentals=int(N * h * h),
        bytes_accessed=int(n_x * N * D * 4 + N * D * 4
                           + D * 3 * D * mm_bytes + 3 * D * 4))

    def build(use_pipeline_mode):
        def spec(shape, index_map, pm):
            if pm is None:
                return pl.BlockSpec(shape, index_map)
            return pl.BlockSpec(shape, index_map, pipeline_mode=pm)

        x_pm = pl.Buffered(x_buffers) if (use_pipeline_mode and x_buffers != 2) else None
        w_pm = pl.Buffered(1) if use_pipeline_mode else None

        x_spec = spec((tm, D), lambda i: (i, 0), x_pm)
        # Grid-invariant weights/bias: constant index_map -> fetched once, stays
        # resident; Buffered(1) drops the useless second buffer (halves weight VMEM).
        w_spec = spec((D, 3 * D), lambda i: (0, 0), w_pm)
        b_spec = spec((1, 3 * D), lambda i: (0, 0), w_pm)
        o_spec = pl.BlockSpec((tm, D), lambda i: (i, 0))

        return pl.pallas_call(
            functools.partial(_mha_kernel, h=h, d_k=d_k,
                              self_attention=self_attention,
                              mm_dtype=mm_dtype,
                              approx_recip=use_bf16_matmul),
            out_shape=jax.ShapeDtypeStruct((N, D), jnp.float32),
            grid_spec=pltpu.PrefetchScalarGridSpec(
                num_scalar_prefetch=0,
                grid=grid,
                in_specs=[x_spec] * n_x + [w_spec, b_spec],
                out_specs=o_spec,
            ),
            compiler_params=pltpu.CompilerParams(
                # Rows are independent -> shard the 1-D grid across TensorCores.
                dimension_semantics=("parallel",),
                vmem_limit_bytes=vmem_limit,
            ),
            cost_estimate=cost,
        )

    inputs = (*xs, w, b)
    try:
        out = jax.block_until_ready(build(True)(*inputs))
    except Exception:
        # Fallback for Pallas versions without pipeline_mode / Buffered support.
        out = build(False)(*inputs)

    return out.reshape(B, S, D)


# ---------------------------------------------------------------------------
# Pure-JAX reference (PyTorch forward, mask=None, dropout off) + init
# ---------------------------------------------------------------------------
def _reference(query, key, value, params, *, h):
    B, S, D = query.shape
    d_k = D // h
    wqkv, bqkv = params
    wq, wk, wv = wqkv[:, :D], wqkv[:, D:2 * D], wqkv[:, 2 * D:]
    bq, bk, bv = bqkv[:, :D], bqkv[:, D:2 * D], bqkv[:, 2 * D:]
    Q = (query.reshape(-1, D) @ wq + bq).reshape(B, S, h, d_k)
    K = (key.reshape(-1, D) @ wk + bk).reshape(B, S, h, d_k)
    V = (value.reshape(-1, D) @ wv + bv).reshape(B, S, h, d_k)
    score = jnp.einsum('bshd,bsgd->bshg', Q, K) / math.sqrt(d_k)
    p = jax.nn.softmax(score, axis=-1)
    x = jnp.einsum('bshg,bsgd->bshd', p, V)
    return x.reshape(B, S, D)


def init_params(key, d_model):
    """nn.Linear-style init (uniform +-1/sqrt(fan_in)).  Weights are stored
    pre-transposed and fused along the output dim: wqkv (D, 3D), bqkv (1, 3D)."""
    bound = 1.0 / math.sqrt(d_model)
    ks = jax.random.split(key, 6)
    ws = [jax.random.uniform(ks[i], (d_model, d_model), jnp.float32, -bound, bound)
          for i in range(3)]
    bs = [jax.random.uniform(ks[3 + i], (1, d_model), jnp.float32, -bound, bound)
          for i in range(3)]
    return (jnp.concatenate(ws, axis=1), jnp.concatenate(bs, axis=1))


# ---------------------------------------------------------------------------
# Main
# ---------------------------------------------------------------------------
if __name__ == "__main__":
    B, S, D, H = 2, 8, 32, 4

    root = jax.random.PRNGKey(0)
    kq, kk, kv, kp = jax.random.split(root, 4)
    query = jax.random.normal(kq, (B, S, D), jnp.float32)
    key_ = jax.random.normal(kk, (B, S, D), jnp.float32)
    value = jax.random.normal(kv, (B, S, D), jnp.float32)
    params = init_params(kp, D)

    # Path 1: distinct q/k/v (3 sliced matmuls), bf16 MXU projections, approx recip.
    out = multi_head_attention(query, key_, value, params, h=H)
    out = jax.block_until_ready(out)
    ref = _reference(query, key_, value, params, h=H)
    assert out.shape == (B, S, D)
    assert jnp.allclose(out, ref, atol=1e-1, rtol=1e-1), "bf16 path mismatch"

    # Path 2: self-attention (single fused QKV matmul), f32 end-to-end,
    # exact softmax normalization (tight check).
    out_sa = multi_head_attention(query, query, query, params, h=H,
                                  use_bf16_matmul=False)
    out_sa = jax.block_until_ready(out_sa)
    ref_sa = _reference(query, query, query, params, h=H)
    assert jnp.allclose(out_sa, ref_sa, atol=1e-2, rtol=1e-2), "f32 path mismatch"

    print("KERNEL_OK")
</pallas_src>

<mosaic_0001>
module attributes {stable_mosaic.version = 11 : i64} {
  func.func @_mha_kernel(%arg0: i32, %arg1: memref<8x32xf32, #tpu.memory_space<vmem>>, %arg2: memref<8x32xf32, #tpu.memory_space<vmem>>, %arg3: memref<8x32xf32, #tpu.memory_space<vmem>>, %arg4: memref<32x96xbf16, #tpu.memory_space<vmem>>, %arg5: memref<1x96xf32, #tpu.memory_space<vmem>>, %arg6: memref<8x32xf32, #tpu.memory_space<vmem>>) attributes {dimension_semantics = [#tpu.dimension_semantics<parallel>], iteration_bounds = array<i64: 2>, scalar_prefetch = 0 : i64, scratch_operands = 0 : i64, tpu.core_type = #tpu.core_type<tc>, window_params = [{transform_indices = @transform_0, window_bounds = array<i64: 8, 32>}, {transform_indices = @transform_1, window_bounds = array<i64: 8, 32>}, {transform_indices = @transform_2, window_bounds = array<i64: 8, 32>}, {pipeline_mode = #tpu.pipeline_mode<synchronous>, transform_indices = @transform_3, window_bounds = array<i64: 32, 96>}, {pipeline_mode = #tpu.pipeline_mode<synchronous>, transform_indices = @transform_4, window_bounds = array<i64: 1, 96>}, {transform_indices = @transform_5, window_bounds = array<i64: 8, 32>}]} {
    %c0 = arith.constant 0 : index
    %c0_0 = arith.constant 0 : index
    %0 = vector.load %arg4[%c0, %c0_0] : memref<32x96xbf16, #tpu.memory_space<vmem>>, vector<32x32xbf16>
    %c0_1 = arith.constant 0 : index
    %c0_2 = arith.constant 0 : index
    %1 = vector.load %arg5[%c0_1, %c0_2] : memref<1x96xf32, #tpu.memory_space<vmem>>, vector<1x32xf32>
    %c0_3 = arith.constant 0 : index
    %c0_4 = arith.constant 0 : index
    %2 = vector.load %arg1[%c0_3, %c0_4] : memref<8x32xf32, #tpu.memory_space<vmem>>, vector<8x32xf32>
    %3 = arith.truncf %2 : vector<8x32xf32> to vector<8x32xbf16>
    %cst = arith.constant dense<0.000000e+00> : vector<8x32xf32>
    %4 = tpu.matmul %3, %0, %cst {dimension_numbers = #tpu.dot_dimension_numbers<[1], [0], [0], [1], [0, 0, 1, 1], [], []>} : vector<8x32xbf16>, vector<32x32xbf16>, vector<8x32xf32> -> vector<8x32xf32>
    %5 = vector.broadcast %1 : vector<1x32xf32> to vector<8x32xf32>
    %6 = arith.addf %4, %5 : vector<8x32xf32>
    %c0_5 = arith.constant 0 : index
    %c32 = arith.constant 32 : index
    %7 = vector.load %arg4[%c0_5, %c32] : memref<32x96xbf16, #tpu.memory_space<vmem>>, vector<32x32xbf16>
    %c0_6 = arith.constant 0 : index
    %c32_7 = arith.constant 32 : index
    %8 = vector.load %arg5[%c0_6, %c32_7] : memref<1x96xf32, #tpu.memory_space<vmem>>, vector<1x32xf32>
    %c0_8 = arith.constant 0 : index
    %c0_9 = arith.constant 0 : index
    %9 = vector.load %arg2[%c0_8, %c0_9] : memref<8x32xf32, #tpu.memory_space<vmem>>, vector<8x32xf32>
    %10 = arith.truncf %9 : vector<8x32xf32> to vector<8x32xbf16>
    %cst_10 = arith.constant dense<0.000000e+00> : vector<8x32xf32>
    %11 = tpu.matmul %10, %7, %cst_10 {dimension_numbers = #tpu.dot_dimension_numbers<[1], [0], [0], [1], [0, 0, 1, 1], [], []>} : vector<8x32xbf16>, vector<32x32xbf16>, vector<8x32xf32> -> vector<8x32xf32>
    %12 = vector.broadcast %8 : vector<1x32xf32> to vector<8x32xf32>
    %13 = arith.addf %11, %12 : vector<8x32xf32>
    %c0_11 = arith.constant 0 : index
    %c64 = arith.constant 64 : index
    %14 = vector.load %arg4[%c0_11, %c64] : memref<32x96xbf16, #tpu.memory_space<vmem>>, vector<32x32xbf16>
    %c0_12 = arith.constant 0 : index
    %c64_13 = arith.constant 64 : index
    %15 = vector.load %arg5[%c0_12, %c64_13] : memref<1x96xf32, #tpu.memory_space<vmem>>, vector<1x32xf32>
    %c0_14 = arith.constant 0 : index
    %c0_15 = arith.constant 0 : index
    %16 = vector.load %arg3[%c0_14, %c0_15] : memref<8x32xf32, #tpu.memory_space<vmem>>, vector<8x32xf32>
    %17 = arith.truncf %16 : vector<8x32xf32> to vector<8x32xbf16>
    %cst_16 = arith.constant dense<0.000000e+00> : vector<8x32xf32>
    %18 = tpu.matmul %17, %14, %cst_16 {dimension_numbers = #tpu.dot_dimension_numbers<[1], [0], [0], [1], [0, 0, 1, 1], [], []>} : vector<8x32xbf16>, vector<32x32xbf16>, vector<8x32xf32> -> vector<8x32xf32>
    %19 = vector.broadcast %15 : vector<1x32xf32> to vector<8x32xf32>
    %20 = arith.addf %18, %19 : vector<8x32xf32>
    %cst_17 = arith.constant 0.353553385 : f32
    %21 = vector.broadcast %cst_17 : f32 to vector<8x32xf32>
    %22 = arith.mulf %6, %21 : vector<8x32xf32>
    %23 = vector.extract_strided_slice %22 {offsets = [0, 0], sizes = [8, 8], strides = [1, 1]} : vector<8x32xf32> to vector<8x8xf32>
    %24 = vector.extract_strided_slice %22 {offsets = [0, 8], sizes = [8, 8], strides = [1, 1]} : vector<8x32xf32> to vector<8x8xf32>
    %25 = vector.extract_strided_slice %22 {offsets = [0, 16], sizes = [8, 8], strides = [1, 1]} : vector<8x32xf32> to vector<8x8xf32>
    %26 = vector.extract_strided_slice %22 {offsets = [0, 24], sizes = [8, 8], strides = [1, 1]} : vector<8x32xf32> to vector<8x8xf32>
    %27 = vector.extract_strided_slice %13 {offsets = [0, 0], sizes = [8, 8], strides = [1, 1]} : vector<8x32xf32> to vector<8x8xf32>
    %28 = vector.extract_strided_slice %13 {offsets = [0, 8], sizes = [8, 8], strides = [1, 1]} : vector<8x32xf32> to vector<8x8xf32>
    %29 = vector.extract_strided_slice %13 {offsets = [0, 16], sizes = [8, 8], strides = [1, 1]} : vector<8x32xf32> to vector<8x8xf32>
    %30 = vector.extract_strided_slice %13 {offsets = [0, 24], sizes = [8, 8], strides = [1, 1]} : vector<8x32xf32> to vector<8x8xf32>
    %31 = vector.extract_strided_slice %20 {offsets = [0, 0], sizes = [8, 8], strides = [1, 1]} : vector<8x32xf32> to vector<8x8xf32>
    %32 = vector.extract_strided_slice %20 {offsets = [0, 8], sizes = [8, 8], strides = [1, 1]} : vector<8x32xf32> to vector<8x8xf32>
    %33 = vector.extract_strided_slice %20 {offsets = [0, 16], sizes = [8, 8], strides = [1, 1]} : vector<8x32xf32> to vector<8x8xf32>
    %34 = vector.extract_strided_slice %20 {offsets = [0, 24], sizes = [8, 8], strides = [1, 1]} : vector<8x32xf32> to vector<8x8xf32>
    %35 = arith.mulf %23, %27 : vector<8x8xf32>
    %cst_18 = arith.constant dense<0.000000e+00> : vector<8xf32>
    %36 = vector.multi_reduction <add>, %35, %cst_18 [1] : vector<8x8xf32> to vector<8xf32>
    %37 = vector.shape_cast %36 : vector<8xf32> to vector<8x1xf32>
    %38 = arith.mulf %23, %28 : vector<8x8xf32>
    %cst_19 = arith.constant dense<0.000000e+00> : vector<8xf32>
    %39 = vector.multi_reduction <add>, %38, %cst_19 [1] : vector<8x8xf32> to vector<8xf32>
    %40 = vector.shape_cast %39 : vector<8xf32> to vector<8x1xf32>
    %41 = arith.mulf %23, %29 : vector<8x8xf32>
    %cst_20 = arith.constant dense<0.000000e+00> : vector<8xf32>
    %42 = vector.multi_reduction <add>, %41, %cst_20 [1] : vector<8x8xf32> to vector<8xf32>
    %43 = vector.shape_cast %42 : vector<8xf32> to vector<8x1xf32>
    %44 = arith.mulf %23, %30 : vector<8x8xf32>
    %cst_21 = arith.constant dense<0.000000e+00> : vector<8xf32>
    %45 = vector.multi_reduction <add>, %44, %cst_21 [1] : vector<8x8xf32> to vector<8xf32>
    %46 = vector.shape_cast %45 : vector<8xf32> to vector<8x1xf32>
    %47 = tpu.concatenate %37, %40, %43, %46 in 1 : vector<8x1xf32>, vector<8x1xf32>, vector<8x1xf32>, vector<8x1xf32> -> vector<8x4xf32>
    %cst_22 = arith.constant dense<0xFF800000> : vector<8xf32>
    %48 = vector.multi_reduction <maximumf>, %47, %cst_22 [1] : vector<8x4xf32> to vector<8xf32>
    %49 = vector.shape_cast %48 : vector<8xf32> to vector<8x1xf32>
    %50 = vector.broadcast %49 : vector<8x1xf32> to vector<8x4xf32>
    %51 = arith.subf %47, %50 : vector<8x4xf32>
    %52 = math.exp %51 : vector<8x4xf32>
    %cst_23 = arith.constant dense<0.000000e+00> : vector<8xf32>
    %53 = vector.multi_reduction <add>, %52, %cst_23 [1] : vector<8x4xf32> to vector<8xf32>
    %54 = vector.shape_cast %53 : vector<8xf32> to vector<8x1xf32>
    %55 = tpu.reciprocal %54 {approx = true} : vector<8x1xf32> -> vector<8x1xf32>
    %56 = vector.broadcast %55 : vector<8x1xf32> to vector<8x4xf32>
    %57 = arith.mulf %52, %56 : vector<8x4xf32>
    %58 = vector.extract_strided_slice %57 {offsets = [0, 0], sizes = [8, 1], strides = [1, 1]} : vector<8x4xf32> to vector<8x1xf32>
    %59 = vector.broadcast %58 : vector<8x1xf32> to vector<8x8xf32>
    %60 = arith.mulf %59, %31 : vector<8x8xf32>
    %61 = vector.extract_strided_slice %57 {offsets = [0, 1], sizes = [8, 1], strides = [1, 1]} : vector<8x4xf32> to vector<8x1xf32>
    %62 = vector.broadcast %61 : vector<8x1xf32> to vector<8x8xf32>
    %63 = arith.mulf %62, %32 : vector<8x8xf32>
    %64 = arith.addf %60, %63 : vector<8x8xf32>
    %65 = vector.extract_strided_slice %57 {offsets = [0, 2], sizes = [8, 1], strides = [1, 1]} : vector<8x4xf32> to vector<8x1xf32>
    %66 = vector.broadcast %65 : vector<8x1xf32> to vector<8x8xf32>
    %67 = arith.mulf %66, %33 : vector<8x8xf32>
    %68 = arith.addf %64, %67 : vector<8x8xf32>
    %69 = vector.extract_strided_slice %57 {offsets = [0, 3], sizes = [8, 1], strides = [1, 1]} : vector<8x4xf32> to vector<8x1xf32>
    %70 = vector.broadcast %69 : vector<8x1xf32> to vector<8x8xf32>
    %71 = arith.mulf %70, %34 : vector<8x8xf32>
    %72 = arith.addf %68, %71 : vector<8x8xf32>
    %73 = arith.mulf %24, %27 : vector<8x8xf32>
    %cst_24 = arith.constant dense<0.000000e+00> : vector<8xf32>
    %74 = vector.multi_reduction <add>, %73, %cst_24 [1] : vector<8x8xf32> to vector<8xf32>
    %75 = vector.shape_cast %74 : vector<8xf32> to vector<8x1xf32>
    %76 = arith.mulf %24, %28 : vector<8x8xf32>
    %cst_25 = arith.constant dense<0.000000e+00> : vector<8xf32>
    %77 = vector.multi_reduction <add>, %76, %cst_25 [1] : vector<8x8xf32> to vector<8xf32>
    %78 = vector.shape_cast %77 : vector<8xf32> to vector<8x1xf32>
    %79 = arith.mulf %24, %29 : vector<8x8xf32>
    %cst_26 = arith.constant dense<0.000000e+00> : vector<8xf32>
    %80 = vector.multi_reduction <add>, %79, %cst_26 [1] : vector<8x8xf32> to vector<8xf32>
    %81 = vector.shape_cast %80 : vector<8xf32> to vector<8x1xf32>
    %82 = arith.mulf %24, %30 : vector<8x8xf32>
    %cst_27 = arith.constant dense<0.000000e+00> : vector<8xf32>
    %83 = vector.multi_reduction <add>, %82, %cst_27 [1] : vector<8x8xf32> to vector<8xf32>
    %84 = vector.shape_cast %83 : vector<8xf32> to vector<8x1xf32>
    %85 = tpu.concatenate %75, %78, %81, %84 in 1 : vector<8x1xf32>, vector<8x1xf32>, vector<8x1xf32>, vector<8x1xf32> -> vector<8x4xf32>
    %cst_28 = arith.constant dense<0xFF800000> : vector<8xf32>
    %86 = vector.multi_reduction <maximumf>, %85, %cst_28 [1] : vector<8x4xf32> to vector<8xf32>
    %87 = vector.shape_cast %86 : vector<8xf32> to vector<8x1xf32>
    %88 = vector.broadcast %87 : vector<8x1xf32> to vector<8x4xf32>
    %89 = arith.subf %85, %88 : vector<8x4xf32>
    %90 = math.exp %89 : vector<8x4xf32>
    %cst_29 = arith.constant dense<0.000000e+00> : vector<8xf32>
    %91 = vector.multi_reduction <add>, %90, %cst_29 [1] : vector<8x4xf32> to vector<8xf32>
    %92 = vector.shape_cast %91 : vector<8xf32> to vector<8x1xf32>
    %93 = tpu.reciprocal %92 {approx = true} : vector<8x1xf32> -> vector<8x1xf32>
    %94 = vector.broadcast %93 : vector<8x1xf32> to vector<8x4xf32>
    %95 = arith.mulf %90, %94 : vector<8x4xf32>
    %96 = vector.extract_strided_slice %95 {offsets = [0, 0], sizes = [8, 1], strides = [1, 1]} : vector<8x4xf32> to vector<8x1xf32>
    %97 = vector.broadcast %96 : vector<8x1xf32> to vector<8x8xf32>
    %98 = arith.mulf %97, %31 : vector<8x8xf32>
    %99 = vector.extract_strided_slice %95 {offsets = [0, 1], sizes = [8, 1], strides = [1, 1]} : vector<8x4xf32> to vector<8x1xf32>
    %100 = vector.broadcast %99 : vector<8x1xf32> to vector<8x8xf32>
    %101 = arith.mulf %100, %32 : vector<8x8xf32>
    %102 = arith.addf %98, %101 : vector<8x8xf32>
    %103 = vector.extract_strided_slice %95 {offsets = [0, 2], sizes = [8, 1], strides = [1, 1]} : vector<8x4xf32> to vector<8x1xf32>
    %104 = vector.broadcast %103 : vector<8x1xf32> to vector<8x8xf32>
    %105 = arith.mulf %104, %33 : vector<8x8xf32>
    %106 = arith.addf %102, %105 : vector<8x8xf32>
    %107 = vector.extract_strided_slice %95 {offsets = [0, 3], sizes = [8, 1], strides = [1, 1]} : vector<8x4xf32> to vector<8x1xf32>
    %108 = vector.broadcast %107 : vector<8x1xf32> to vector<8x8xf32>
    %109 = arith.mulf %108, %34 : vector<8x8xf32>
    %110 = arith.addf %106, %109 : vector<8x8xf32>
    %111 = arith.mulf %25, %27 : vector<8x8xf32>
    %cst_30 = arith.constant dense<0.000000e+00> : vector<8xf32>
    %112 = vector.multi_reduction <add>, %111, %cst_30 [1] : vector<8x8xf32> to vector<8xf32>
    %113 = vector.shape_cast %112 : vector<8xf32> to vector<8x1xf32>
    %114 = arith.mulf %25, %28 : vector<8x8xf32>
    %cst_31 = arith.constant dense<0.000000e+00> : vector<8xf32>
    %115 = vector.multi_reduction <add>, %114, %cst_31 [1] : vector<8x8xf32> to vector<8xf32>
    %116 = vector.shape_cast %115 : vector<8xf32> to vector<8x1xf32>
    %117 = arith.mulf %25, %29 : vector<8x8xf32>
    %cst_32 = arith.constant dense<0.000000e+00> : vector<8xf32>
    %118 = vector.multi_reduction <add>, %117, %cst_32 [1] : vector<8x8xf32> to vector<8xf32>
    %119 = vector.shape_cast %118 : vector<8xf32> to vector<8x1xf32>
    %120 = arith.mulf %25, %30 : vector<8x8xf32>
    %cst_33 = arith.constant dense<0.000000e+00> : vector<8xf32>
    %121 = vector.multi_reduction <add>, %120, %cst_33 [1] : vector<8x8xf32> to vector<8xf32>
    %122 = vector.shape_cast %121 : vector<8xf32> to vector<8x1xf32>
    %123 = tpu.concatenate %113, %116, %119, %122 in 1 : vector<8x1xf32>, vector<8x1xf32>, vector<8x1xf32>, vector<8x1xf32> -> vector<8x4xf32>
    %cst_34 = arith.constant dense<0xFF800000> : vector<8xf32>
    %124 = vector.multi_reduction <maximumf>, %123, %cst_34 [1] : vector<8x4xf32> to vector<8xf32>
    %125 = vector.shape_cast %124 : vector<8xf32> to vector<8x1xf32>
    %126 = vector.broadcast %125 : vector<8x1xf32> to vector<8x4xf32>
    %127 = arith.subf %123, %126 : vector<8x4xf32>
    %128 = math.exp %127 : vector<8x4xf32>
    %cst_35 = arith.constant dense<0.000000e+00> : vector<8xf32>
    %129 = vector.multi_reduction <add>, %128, %cst_35 [1] : vector<8x4xf32> to vector<8xf32>
    %130 = vector.shape_cast %129 : vector<8xf32> to vector<8x1xf32>
    %131 = tpu.reciprocal %130 {approx = true} : vector<8x1xf32> -> vector<8x1xf32>
    %132 = vector.broadcast %131 : vector<8x1xf32> to vector<8x4xf32>
    %133 = arith.mulf %128, %132 : vector<8x4xf32>
    %134 = vector.extract_strided_slice %133 {offsets = [0, 0], sizes = [8, 1], strides = [1, 1]} : vector<8x4xf32> to vector<8x1xf32>
    %135 = vector.broadcast %134 : vector<8x1xf32> to vector<8x8xf32>
    %136 = arith.mulf %135, %31 : vector<8x8xf32>
    %137 = vector.extract_strided_slice %133 {offsets = [0, 1], sizes = [8, 1], strides = [1, 1]} : vector<8x4xf32> to vector<8x1xf32>
    %138 = vector.broadcast %137 : vector<8x1xf32> to vector<8x8xf32>
    %139 = arith.mulf %138, %32 : vector<8x8xf32>
    %140 = arith.addf %136, %139 : vector<8x8xf32>
    %141 = vector.extract_strided_slice %133 {offsets = [0, 2], sizes = [8, 1], strides = [1, 1]} : vector<8x4xf32> to vector<8x1xf32>
    %142 = vector.broadcast %141 : vector<8x1xf32> to vector<8x8xf32>
    %143 = arith.mulf %142, %33 : vector<8x8xf32>
    %144 = arith.addf %140, %143 : vector<8x8xf32>
    %145 = vector.extract_strided_slice %133 {offsets = [0, 3], sizes = [8, 1], strides = [1, 1]} : vector<8x4xf32> to vector<8x1xf32>
    %146 = vector.broadcast %145 : vector<8x1xf32> to vector<8x8xf32>
    %147 = arith.mulf %146, %34 : vector<8x8xf32>
    %148 = arith.addf %144, %147 : vector<8x8xf32>
    %149 = arith.mulf %26, %27 : vector<8x8xf32>
    %cst_36 = arith.constant dense<0.000000e+00> : vector<8xf32>
    %150 = vector.multi_reduction <add>, %149, %cst_36 [1] : vector<8x8xf32> to vector<8xf32>
    %151 = vector.shape_cast %150 : vector<8xf32> to vector<8x1xf32>
    %152 = arith.mulf %26, %28 : vector<8x8xf32>
    %cst_37 = arith.constant dense<0.000000e+00> : vector<8xf32>
    %153 = vector.multi_reduction <add>, %152, %cst_37 [1] : vector<8x8xf32> to vector<8xf32>
    %154 = vector.shape_cast %153 : vector<8xf32> to vector<8x1xf32>
    %155 = arith.mulf %26, %29 : vector<8x8xf32>
    %cst_38 = arith.constant dense<0.000000e+00> : vector<8xf32>
    %156 = vector.multi_reduction <add>, %155, %cst_38 [1] : vector<8x8xf32> to vector<8xf32>
    %157 = vector.shape_cast %156 : vector<8xf32> to vector<8x1xf32>
    %158 = arith.mulf %26, %30 : vector<8x8xf32>
    %cst_39 = arith.constant dense<0.000000e+00> : vector<8xf32>
    %159 = vector.multi_reduction <add>, %158, %cst_39 [1] : vector<8x8xf32> to vector<8xf32>
    %160 = vector.shape_cast %159 : vector<8xf32> to vector<8x1xf32>
    %161 = tpu.concatenate %151, %154, %157, %160 in 1 : vector<8x1xf32>, vector<8x1xf32>, vector<8x1xf32>, vector<8x1xf32> -> vector<8x4xf32>
    %cst_40 = arith.constant dense<0xFF800000> : vector<8xf32>
    %162 = vector.multi_reduction <maximumf>, %161, %cst_40 [1] : vector<8x4xf32> to vector<8xf32>
    %163 = vector.shape_cast %162 : vector<8xf32> to vector<8x1xf32>
    %164 = vector.broadcast %163 : vector<8x1xf32> to vector<8x4xf32>
    %165 = arith.subf %161, %164 : vector<8x4xf32>
    %166 = math.exp %165 : vector<8x4xf32>
    %cst_41 = arith.constant dense<0.000000e+00> : vector<8xf32>
    %167 = vector.multi_reduction <add>, %166, %cst_41 [1] : vector<8x4xf32> to vector<8xf32>
    %168 = vector.shape_cast %167 : vector<8xf32> to vector<8x1xf32>
    %169 = tpu.reciprocal %168 {approx = true} : vector<8x1xf32> -> vector<8x1xf32>
    %170 = vector.broadcast %169 : vector<8x1xf32> to vector<8x4xf32>
    %171 = arith.mulf %166, %170 : vector<8x4xf32>
    %172 = vector.extract_strided_slice %171 {offsets = [0, 0], sizes = [8, 1], strides = [1, 1]} : vector<8x4xf32> to vector<8x1xf32>
    %173 = vector.broadcast %172 : vector<8x1xf32> to vector<8x8xf32>
    %174 = arith.mulf %173, %31 : vector<8x8xf32>
    %175 = vector.extract_strided_slice %171 {offsets = [0, 1], sizes = [8, 1], strides = [1, 1]} : vector<8x4xf32> to vector<8x1xf32>
    %176 = vector.broadcast %175 : vector<8x1xf32> to vector<8x8xf32>
    %177 = arith.mulf %176, %32 : vector<8x8xf32>
    %178 = arith.addf %174, %177 : vector<8x8xf32>
    %179 = vector.extract_strided_slice %171 {offsets = [0, 2], sizes = [8, 1], strides = [1, 1]} : vector<8x4xf32> to vector<8x1xf32>
    %180 = vector.broadcast %179 : vector<8x1xf32> to vector<8x8xf32>
    %181 = arith.mulf %180, %33 : vector<8x8xf32>
    %182 = arith.addf %178, %181 : vector<8x8xf32>
    %183 = vector.extract_strided_slice %171 {offsets = [0, 3], sizes = [8, 1], strides = [1, 1]} : vector<8x4xf32> to vector<8x1xf32>
    %184 = vector.broadcast %183 : vector<8x1xf32> to vector<8x8xf32>
    %185 = arith.mulf %184, %34 : vector<8x8xf32>
    %186 = arith.addf %182, %185 : vector<8x8xf32>
    %187 = tpu.concatenate %72, %110, %148, %186 in 1 : vector<8x8xf32>, vector<8x8xf32>, vector<8x8xf32>, vector<8x8xf32> -> vector<8x32xf32>
    %c0_42 = arith.constant 0 : index
    %c0_43 = arith.constant 0 : index
    %188 = vector.load %arg6[%c0_42, %c0_43] : memref<8x32xf32, #tpu.memory_space<vmem>>, vector<8x32xf32>
    tpu.vector_store %arg6[%c0_42, %c0_43], %187 {strides = array<i32>} : memref<8x32xf32, #tpu.memory_space<vmem>>, vector<8x32xf32>,
    return
  }
  func.func @transform_0(%arg0: i32) -> (i32, i32) {
    %c0_i32 = arith.constant 0 : i32
    %c0_i32_0 = arith.constant 0 : i32
    return %arg0, %c0_i32 : i32, i32
  }
  func.func @transform_1(%arg0: i32) -> (i32, i32) {
    %c0_i32 = arith.constant 0 : i32
    %c0_i32_0 = arith.constant 0 : i32
    return %arg0, %c0_i32 : i32, i32
  }
  func.func @transform_2(%arg0: i32) -> (i32, i32) {
    %c0_i32 = arith.constant 0 : i32
    %c0_i32_0 = arith.constant 0 : i32
    return %arg0, %c0_i32 : i32, i32
  }
  func.func @transform_3(%arg0: i32) -> (i32, i32) {
    %c0_i32 = arith.constant 0 : i32
    %c0_i32_0 = arith.constant 0 : i32
    %c0_i32_1 = arith.constant 0 : i32
    return %c0_i32, %c0_i32_0 : i32, i32
  }
  func.func @transform_4(%arg0: i32) -> (i32, i32) {
    %c0_i32 = arith.constant 0 : i32
    %c0_i32_0 = arith.constant 0 : i32
    %c0_i32_1 = arith.constant 0 : i32
    return %c0_i32, %c0_i32_0 : i32, i32
  }
  func.func @transform_5(%arg0: i32) -> (i32, i32) {
    %c0_i32 = arith.constant 0 : i32
    %c0_i32_0 = arith.constant 0 : i32
    return %arg0, %c0_i32 : i32, i32
  }
}

</mosaic_0001>

<llo_original>
// kernel: tpu_custom_call.1
$region0: #{tpu_custom_call.1}
  #allocation0 [shape = 'u32[]', space=smem, size = 0x4, offset = 0x4, fixed_abs, tag = 'smem constant byte address 0x4 - core index']
  #allocation1 [shape = 'u32[144,128]{1,0:T(1,128)}', space=vmem, size = 0x12000, scoped, tag = 'internal scratch']
  %s0 = inlined_call_operand.hbm [shape: f32[16,32], index: 0, kind: input, shape index: {}]
  %s1 = inlined_call_operand.hbm [shape: f32[16,32], index: 1, kind: input, shape index: {}]
  %s2 = inlined_call_operand.hbm [shape: f32[16,32], index: 2, kind: input, shape index: {}]
  %s3 = inlined_call_operand.hbm [shape: bf16[32,96], index: 3, kind: input, shape index: {}]
  %s4 = inlined_call_operand.vmem [shape: f32[1,96], index: 4, kind: input, shape index: {}]
  %s5 = inlined_call_operand.hbm [shape: f32[16,32], index: 5, kind: output, shape index: {}]
  %s6 = sld [smem:[#allocation0]]
  $region69: #{tpu_custom_call.1} parent=0
    _
  %s8 = ssub.s32 1, %s6
  %s9 = scalar_select 0, %s8, %s6
  $region1: #{tpu_custom_call.1} parent=0
    #allocation2 [shape = 'u8[8192]{0}', space=vmem, size = 0x2000, scoped, tag = 'input window, operand 0']
    #allocation3 [shape = 's32[2]{0}', space=sflag, size = 0x8, scoped, tag = 'scoped memory for tpu_custom_call.1']
    #allocation4 [shape = 's32[2]{0}', space=sflag, size = 0x8, scoped, tag = 'scoped memory for tpu_custom_call.1']
    #allocation5 [shape = 'u8[8192]{0}', space=vmem, size = 0x2000, scoped, tag = 'input window, operand 1']
    #allocation6 [shape = 's32[2]{0}', space=sflag, size = 0x8, scoped, tag = 'scoped memory for tpu_custom_call.1']
    #allocation7 [shape = 'u8[8192]{0}', space=vmem, size = 0x2000, scoped, tag = 'input window, operand 2']
    #allocation8 [shape = 'u8[8192]{0}', space=vmem, size = 0x2000, scoped, tag = 'input window, operand 3, single buffered']
    #allocation9 [shape = 's32[1]{0}', space=sflag, size = 0x4, scoped, tag = 'scoped memory for tpu_custom_call.1']
    #allocation10 [shape = 'u8[8192]{0}', space=vmem, size = 0x2000, scoped, tag = 'output window, operand 0']
    %10 = vsyncpa [#allocation3], 0
    %s11 = scalar_lea.sflag [#allocation3], 1
    %12 = vsyncpa %s11, 0
    %13 = vsyncpa [#allocation6], 0
    %s14 = scalar_lea.sflag [#allocation6], 1
    %15 = vsyncpa %s14, 0
    %16 = vsyncpa [#allocation9], 0
    %17 = vsyncpa [#allocation4], 0
    %s18 = scalar_lea.sflag [#allocation4], 1
    %19 = vsyncpa %s18, 0
    loop: start=0, step=1, limit=4
    $region2: #{tpu_custom_call.1} parent=1 // loop_pre_header
      _
    $region3: #{tpu_custom_call.1} parent=1 // loop_header
      %s21 = sphi 0, %s25
      %p22 = scmp.ge.s32.totalorder %s21, 4
      %s31 = sphi 0, %s33
      %s34 = sphi 0, %s31
      %s35 = sphi 0, %s34
      %s51 = sphi 0, %s35
      %s57 = sphi 0, %s59
      %s60 = sphi 0, %s57
      %s61 = sphi 0, %s60
      %s77 = sphi 0, %s61
      %s83 = sphi 0, %s85
      %s86 = sphi 0, %s83
      %s87 = sphi 0, %s86
      %s103 = sphi 0, %s87
      %s107 = sphi 0, %s107
      %s109 = sphi 0, %s107
      %s110 = sphi 0, %s109
      %s124 = sphi 0, %s110
      %s128 = sphi 0, %s128
      %s130 = sphi 0, %s128
      %s131 = sphi 0, %s130
      %s145 = sphi 0, %s131
      %s151 = sphi 0, %s153
      %s154 = sphi 0, %s151
      %s155 = sphi 0, %s154
      %s171 = sphi 0, %s155
    $region4: #{tpu_custom_call.1} parent=1 // loop_header_branch
      %24 = sbr.rel (%p22) target = $region8
    $region5: #{tpu_custom_call.1} parent=1 // loop_body
      %s26 = ssub.s32 %s21, 1
      %s27 = ssub.s32 %s21, 2
      %s28 = sadd.s32 %s21, 1
      %s29 = ssub.s32 %s21, %s28
      %p30 = scmp.eq.s32.totalorder %s29, 0
      %s32 = sadd.s32 %s31, 1
      %s33 = scalar_select %p30, %s31, %s32
      %p36 = pneg %p30
      %p37 = scmp.eq.s32.totalorder %s21, 1
      %p38 = por %p36, %p37
      %p39 = scmp.ne.s32.totalorder %s31, %s34
      %p40 = scmp.eq.s32.totalorder %s21, 0
      %p41 = por %p39, %p40
      %p42 = scmp.ne.s32.totalorder %s31, %s34
      %p43 = scmp.eq.s32.totalorder %s26, 1
      %p44 = por %p42, %p43
      %p45 = scmp.ne.s32.totalorder %s34, %s35
      %p46 = scmp.eq.s32.totalorder %s26, 0
      %p47 = por %p45, %p46
      %p48 = scmp.ne.s32.totalorder %s34, %s35
      %p49 = scmp.eq.s32.totalorder %s27, 1
      %p50 = por %p48, %p49
      %p52 = scmp.ne.s32.totalorder %s35, %s51
      %p53 = scmp.eq.s32.totalorder %s27, 0
      %p54 = por %p52, %p53
      %s55 = ssub.s32 %s21, %s28
      %p56 = scmp.eq.s32.totalorder %s55, 0
      %s58 = sadd.s32 %s57, 1
      %s59 = scalar_select %p56, %s57, %s58
      %p62 = pneg %p56
      %p63 = scmp.eq.s32.totalorder %s21, 1
      %p64 = por %p62, %p63
      %p65 = scmp.ne.s32.totalorder %s57, %s60
      %p66 = scmp.eq.s32.totalorder %s21, 0
      %p67 = por %p65, %p66
      %p68 = scmp.ne.s32.totalorder %s57, %s60
      %p69 = scmp.eq.s32.totalorder %s26, 1
      %p70 = por %p68, %p69
      %p71 = scmp.ne.s32.totalorder %s60, %s61
      %p72 = scmp.eq.s32.totalorder %s26, 0
      %p73 = por %p71, %p72
      %p74 = scmp.ne.s32.totalorder %s60, %s61
      %p75 = scmp.eq.s32.totalorder %s27, 1
      %p76 = por %p74, %p75
      %p78 = scmp.ne.s32.totalorder %s61, %s77
      %p79 = scmp.eq.s32.totalorder %s27, 0
      %p80 = por %p78, %p79
      %s81 = ssub.s32 %s21, %s28
      %p82 = scmp.eq.s32.totalorder %s81, 0
      %s84 = sadd.s32 %s83, 1
      %s85 = scalar_select %p82, %s83, %s84
      %p88 = pneg %p82
      %p89 = scmp.eq.s32.totalorder %s21, 1
      %p90 = por %p88, %p89
      %p91 = scmp.ne.s32.totalorder %s83, %s86
      %p92 = scmp.eq.s32.totalorder %s21, 0
      %p93 = por %p91, %p92
      %p94 = scmp.ne.s32.totalorder %s83, %s86
      %p95 = scmp.eq.s32.totalorder %s26, 1
      %p96 = por %p94, %p95
      %p97 = scmp.ne.s32.totalorder %s86, %s87
      %p98 = scmp.eq.s32.totalorder %s26, 0
      %p99 = por %p97, %p98
      %p100 = scmp.ne.s32.totalorder %s86, %s87
      %p101 = scmp.eq.s32.totalorder %s27, 1
      %p102 = por %p100, %p101
      %p104 = scmp.ne.s32.totalorder %s87, %s103
      %p105 = scmp.eq.s32.totalorder %s27, 0
      %p106 = por %p104, %p105
      %s108 = sadd.s32 %s107, 1
      %p111 = scmp.eq.s32.totalorder %s21, 1
      %p112 = scmp.ne.s32.totalorder %s107, %s109
      %p113 = scmp.eq.s32.totalorder %s21, 0
      %p114 = por %p112, %p113
      %p115 = scmp.ne.s32.totalorder %s107, %s109
      %p116 = scmp.eq.s32.totalorder %s26, 1
      %p117 = por %p115, %p116
      %p118 = scmp.ne.s32.totalorder %s109, %s110
      %p119 = scmp.eq.s32.totalorder %s26, 0
      %p120 = por %p118, %p119
      %p121 = scmp.ne.s32.totalorder %s109, %s110
      %p122 = scmp.eq.s32.totalorder %s27, 1
      %p123 = por %p121, %p122
      %p125 = scmp.ne.s32.totalorder %s110, %s124
      %p126 = scmp.eq.s32.totalorder %s27, 0
      %p127 = por %p125, %p126
      %s129 = sadd.s32 %s128, 1
      %p132 = scmp.eq.s32.totalorder %s21, 1
      %p133 = scmp.ne.s32.totalorder %s128, %s130
      %p134 = scmp.eq.s32.totalorder %s21, 0
      %p135 = por %p133, %p134
      %p136 = scmp.ne.s32.totalorder %s128, %s130
      %p137 = scmp.eq.s32.totalorder %s26, 1
      %p138 = por %p136, %p137
      %p139 = scmp.ne.s32.totalorder %s130, %s131
      %p140 = scmp.eq.s32.totalorder %s26, 0
      %p141 = por %p139, %p140
      %p142 = scmp.ne.s32.totalorder %s130, %s131
      %p143 = scmp.eq.s32.totalorder %s27, 1
      %p144 = por %p142, %p143
      %p146 = scmp.ne.s32.totalorder %s131, %s145
      %p147 = scmp.eq.s32.totalorder %s27, 0
      %p148 = por %p146, %p147
      %s149 = ssub.s32 %s21, %s28
      %p150 = scmp.eq.s32.totalorder %s149, 0
      %s152 = sadd.s32 %s151, 1
      %s153 = scalar_select %p150, %s151, %s152
      %p156 = pneg %p150
      %p157 = scmp.eq.s32.totalorder %s21, 1
      %p158 = por %p156, %p157
      %p159 = scmp.ne.s32.totalorder %s151, %s154
      %p160 = scmp.eq.s32.totalorder %s21, 0
      %p161 = por %p159, %p160
      %p162 = scmp.ne.s32.totalorder %s151, %s154
      %p163 = scmp.eq.s32.totalorder %s26, 1
      %p164 = por %p162, %p163
      %p165 = scmp.ne.s32.totalorder %s154, %s155
      %p166 = scmp.eq.s32.totalorder %s26, 0
      %p167 = por %p165, %p166
      %p168 = scmp.ne.s32.totalorder %s154, %s155
      %p169 = scmp.eq.s32.totalorder %s27, 1
      %p170 = por %p168, %p169
      %p172 = scmp.ne.s32.totalorder %s155, %s171
      %p173 = scmp.eq.s32.totalorder %s27, 0
      %p174 = por %p172, %p173
      %p175 = scmp.le.s32.totalorder 1, %s21
      %p176 = scmp.lt.s32.totalorder %s21, 3
      %p177 = pnand %p175, %p176
      %p178 = pneg %p177
      // Predicated region
      $region9: #{tpu_custom_call.1} parent=5 // pred_check
        _
      $region10: #{tpu_custom_call.1} parent=5 // pred_check_branch
        %180 = sbr.rel (%p177) target = $region12
      $region11: #{tpu_custom_call.1} parent=5 // pred_region
        %s181 = ssub.s32 %s21, 1
        // Predicated region
        $region13: #{tpu_custom_call.1} parent=11 // pred_check
          %p182 = pneg %p120
        $region14: #{tpu_custom_call.1} parent=11 // pred_check_branch
          %184 = sbr.rel (%p182) target = $region16
        $region15: #{tpu_custom_call.1} parent=11 // pred_region
          %s186 = ssub.s32 256, 256
          %187 = vsyncadd [#allocation9], %s186
          %s188 = sshll.u32 [#allocation8], 4
          %s189 = int_to_ptr.vmem [resolvable:$true] %s188
          %194 = dma.hbm_to_vmem [thread:$0]  %s3, 256, %s189, [#allocation9], 64, 64, 4
        $region16: #{tpu_custom_call.1} parent=11 // pred_fallthru
          _
        // Predicated region
        $region17: #{tpu_custom_call.1} parent=11 // pred_check
          %p195 = pneg %p141
        $region18: #{tpu_custom_call.1} parent=11 // pred_check_branch
          %197 = sbr.rel (%p195) target = $region20
        $region19: #{tpu_custom_call.1} parent=11 // pred_region
          _
        $region20: #{tpu_custom_call.1} parent=11 // pred_fallthru
          _
      $region12: #{tpu_custom_call.1} parent=5 // pred_fallthru
        _
      %p198 = scmp.lt.s32.totalorder %s21, 2
      // Predicated region
      $region21: #{tpu_custom_call.1} parent=5 // pred_check
        %p199 = pneg %p198
      $region22: #{tpu_custom_call.1} parent=5 // pred_check_branch
        %201 = sbr.rel (%p199) target = $region24
      $region23: #{tpu_custom_call.1} parent=5 // pred_region
        // Predicated region
        $region25: #{tpu_custom_call.1} parent=23 // pred_check
          %p202 = pneg %p41
        $region26: #{tpu_custom_call.1} parent=23 // pred_check_branch
          %204 = sbr.rel (%p202) target = $region28
        $region27: #{tpu_custom_call.1} parent=23 // pred_region
          %s205 = sand.u32 %s31, 1
          %s206 = scalar_lea.sflag [#allocation3], %s205
          %s207 = sand.u32 %s31, 1
          %s208 = smul.addr %s207, 8
          %s209 = scalar_lea.vmem [#allocation2], %s208
          %s211 = ssub.s32 128, 128
          %212 = vsyncadd %s206, %s211
          %s213 = smul.addr %s21, 128
          %s214 = scalar_lea.hbm %s0, %s213
          %s216 = sshll.u32 %s209, 4
          %s217 = int_to_ptr.vmem [resolvable:$true] %s216
          %219 = dma.hbm_to_vmem [thread:$0]  %s214, 128, %s217, %s206
        $region28: #{tpu_custom_call.1} parent=23 // pred_fallthru
          _
        // Predicated region
        $region29: #{tpu_custom_call.1} parent=23 // pred_check
          %p220 = pneg %p67
        $region30: #{tpu_custom_call.1} parent=23 // pred_check_branch
          %222 = sbr.rel (%p220) target = $region32
        $region31: #{tpu_custom_call.1} parent=23 // pred_region
          %s223 = sand.u32 %s21, 1
          %s224 = scalar_lea.sflag [#allocation6], %s223
          %s225 = sand.u32 %s57, 1
          %s226 = smul.addr %s225, 8
          %s227 = scalar_lea.vmem [#allocation5], %s226
          %s229 = ssub.s32 128, 128
          %230 = vsyncadd %s224, %s229
          %s231 = smul.addr %s21, 128
          %s232 = scalar_lea.hbm %s1, %s231
          %s234 = sshll.u32 %s227, 4
          %s235 = int_to_ptr.vmem [resolvable:$true] %s234
          %237 = dma.hbm_to_vmem [thread:$0]  %s232, 128, %s235, %s224
        $region32: #{tpu_custom_call.1} parent=23 // pred_fallthru
          _
        // Predicated region
        $region33: #{tpu_custom_call.1} parent=23 // pred_check
          %p238 = pneg %p93
        $region34: #{tpu_custom_call.1} parent=23 // pred_check_branch
          %240 = sbr.rel (%p238) target = $region36
        $region35: #{tpu_custom_call.1} parent=23 // pred_region
          %s241 = sand.u32 %s21, 1
          %s242 = scalar_lea.sflag [#allocation6], %s241
          %s243 = sand.u32 %s83, 1
          %s244 = smul.addr %s243, 8
          %s245 = scalar_lea.vmem [#allocation7], %s244
          %s247 = ssub.s32 128, 128
          %248 = vsyncadd %s242, %s247
          %s249 = smul.addr %s21, 128
          %s250 = scalar_lea.hbm %s2, %s249
          %s252 = sshll.u32 %s245, 4
          %s253 = int_to_ptr.vmem [resolvable:$true] %s252
          %255 = dma.hbm_to_vmem [thread:$0]  %s250, 128, %s253, %s242
        $region36: #{tpu_custom_call.1} parent=23 // pred_fallthru
          _
      $region24: #{tpu_custom_call.1} parent=5 // pred_fallthru
        _
      %p256 = scmp.le.s32.totalorder 1, %s21
      %p257 = scmp.lt.s32.totalorder %s21, 3
      %p258 = pnand %p256, %p257
      %p259 = pneg %p258
      // Predicated region
      $region37: #{tpu_custom_call.1} parent=5 // pred_check
        _
      $region38: #{tpu_custom_call.1} parent=5 // pred_check_branch
        %261 = sbr.rel (%p258) target = $region40
      $region39: #{tpu_custom_call.1} parent=5 // pred_region
        %s262 = ssub.s32 %s21, 1
        %s263 = sand.u32 %s34, 1
        %s264 = scalar_lea.sflag [#allocation3], %s263
        %s265 = sand.u32 %s34, 1
        %s266 = smul.addr %s265, 8
        %s267 = scalar_lea.vmem [#allocation2], %s266
        // Predicated region
        $region41: #{tpu_custom_call.1} parent=39 // pred_check
          %p268 = pneg %p47
        $region42: #{tpu_custom_call.1} parent=39 // pred_check_branch
          %270 = sbr.rel (%p268) target = $region44
        $region43: #{tpu_custom_call.1} parent=39 // pred_region
          %271 = dma.done %s264, 128
        $region44: #{tpu_custom_call.1} parent=39 // pred_fallthru
          _
        %s272 = sand.u32 %s26, 1
        %s273 = scalar_lea.sflag [#allocation6], %s272
        %s274 = sand.u32 %s60, 1
        %s275 = smul.addr %s274, 8
        %s276 = scalar_lea.vmem [#allocation5], %s275
        // Predicated region
        $region45: #{tpu_custom_call.1} parent=39 // pred_check
          %p277 = pneg %p73
        $region46: #{tpu_custom_call.1} parent=39 // pred_check_branch
          %279 = sbr.rel (%p277) target = $region48
        $region47: #{tpu_custom_call.1} parent=39 // pred_region
          %280 = dma.done %s273, 128
        $region48: #{tpu_custom_call.1} parent=39 // pred_fallthru
          _
        %s281 = sand.u32 %s26, 1
        %s282 = scalar_lea.sflag [#allocation6], %s281
        %s283 = sand.u32 %s86, 1
        %s284 = smul.addr %s283, 8
        %s285 = scalar_lea.vmem [#allocation7], %s284
        // Predicated region
        $region49: #{tpu_custom_call.1} parent=39 // pred_check
          %p286 = pneg %p99
        $region50: #{tpu_custom_call.1} parent=39 // pred_check_branch
          %288 = sbr.rel (%p286) target = $region52
        $region51: #{tpu_custom_call.1} parent=39 // pred_region
          %289 = dma.done %s282, 128
        $region52: #{tpu_custom_call.1} parent=39 // pred_fallthru
          _
        // Predicated region
        $region53: #{tpu_custom_call.1} parent=39 // pred_check
          %p290 = pneg %p120
        $region54: #{tpu_custom_call.1} parent=39 // pred_check_branch
          %292 = sbr.rel (%p290) target = $region56
        $region55: #{tpu_custom_call.1} parent=39 // pred_region
          %293 = dma.done [#allocation9], 256
        $region56: #{tpu_custom_call.1} parent=39 // pred_fallthru
          _
        %s294 = sand.u32 %s34, 1
        %s295 = scalar_lea.sflag [#allocation3], %s294
        %s296 = sand.u32 %s34, 1
        %s297 = smul.addr %s296, 8
        %s298 = scalar_lea.vmem [#allocation2], %s297
        %p299 = pneg %p47
        %p300 = pneg %p44
        %s301 = sand.u32 %s26, 1
        %s302 = scalar_lea.sflag [#allocation6], %s301
        %s303 = sand.u32 %s60, 1
        %s304 = smul.addr %s303, 8
        %s305 = scalar_lea.vmem [#allocation5], %s304
        %p306 = pneg %p73
        %p307 = pneg %p70
        %s308 = sand.u32 %s26, 1
        %s309 = scalar_lea.sflag [#allocation6], %s308
        %s310 = sand.u32 %s86, 1
        %s311 = smul.addr %s310, 8
        %s312 = scalar_lea.vmem [#allocation7], %s311
        %p313 = pneg %p99
        %p314 = pneg %p96
        %p315 = pneg %p120
        %p316 = pneg %p117
        %p317 = pneg %p141
        %p318 = pneg %p138
        %p319 = pneg %p167
        %p320 = pneg %p164
        %s321 = sand.u32 %s154, 1
        %s322 = scalar_lea.sflag [#allocation4], %s321
        %s323 = sand.u32 %s154, 1
        %s324 = smul.addr %s323, 8
        %s325 = scalar_lea.vmem [#allocation10], %s324
        %v327 = vld [vmem:[#allocation8] sm:$0xf]
        %v328 = vld [vmem:[#allocation8 + $0x4] sm:$0xf]
        %v329 = vld [vmem:[#allocation8 + $0x8] sm:$0xf]
        %v330 = vld [vmem:[#allocation8 + $0xc] sm:$0xf]
        %v331 = vld [vmem:[%s4] sm:$0x1]
        %v332 = vld [vmem:[%s267] sm:$0xff]
        %v333 = vpack.c.bf16 %v332, %v332
        %v335 = vlaneseq
        %v336 = vshrl.u32 %v335, 7
        %v337 = vsub.s32 0, %v336
        %v338 = vrot.slane %v331, %v337
        %v344 = vunpack.c.l.b16 %v327
        %v345 = vunpack.c.l.b16 %v328
        %v346 = vunpack.c.l.b16 %v329
        %v347 = vunpack.c.l.b16 %v330
        %v348 = vpack.c.b16 %v345, %v344
        %v349 = vpack.c.b16 %v347, %v346
        %vm352 = vcmask 261120
        %v354 = vsel %vm352, %v333, 0
        %356 = vmatprep.subr.bf16.mxu0 0
        %357 = vmatpush1.bf16.msra.mxu0 %v348
        %358 = vmatprep.subr.bf16.mxu0 0
        %359 = vmatpush1.bf16.msra.mxu0 %v349
        %360 = vmatprep.subr.bf16.mxu0 0
        %361 = vmatpush1.bf16.msra.mxu0 0
        %362 = vmatprep.subr.bf16.mxu0 0
        %363 = vmatpush1.bf16.msra.mxu0 0
        %364 = vmatprep.subr.bf16.mxu0 0
        %365 = vmatpush1.bf16.msra.mxu0 0
        %366 = vmatprep.subr.bf16.mxu0 0
        %367 = vmatpush1.bf16.msra.mxu0 0
        %368 = vmatprep.subr.bf16.mxu0 0
        %369 = vmatpush1.bf16.msra.mxu0 0
        %370 = vmatprep.subr.bf16.mxu0 0
        %371 = vmatpush1.bf16.msra.mxu0 0
        %372 = vmatprep.subr.bf16.mxu0 0
        %373 = vmatpush1.bf16.msra.mxu0 0
        %374 = vmatprep.subr.bf16.mxu0 0
        %375 = vmatpush1.bf16.msra.mxu0 0
        %376 = vmatprep.subr.bf16.mxu0 0
        %377 = vmatpush1.bf16.msra.mxu0 0
        %378 = vmatprep.subr.bf16.mxu0 0
        %379 = vmatpush1.bf16.msra.mxu0 0
        %380 = vmatprep.subr.bf16.mxu0 0
        %381 = vmatpush1.bf16.msra.mxu0 0
        %382 = vmatprep.subr.bf16.mxu0 0
        %383 = vmatpush1.bf16.msra.mxu0 0
        %384 = vmatprep.subr.bf16.mxu0 0
        %385 = vmatpush1.bf16.msra.mxu0 0
        %386 = vmatprep.subr.bf16.mxu0 0
        %387 = vmatpush1.bf16.msra.mxu0 0
        %388 = vmatprep.mubr.bf16.mxu0 0
        %389 = vmatmul.mubr.bf16.gmra.mrb[0].mxu0 %v354
        %v390 = vpop.f32.mrb[0].mxu0
        %v391 = vadd.f32 %v338, %v390
        %v392 = vpop.f32.mrb[0].mxu0
        %v393 = vpop.f32.mrb[0].mxu0
        %v394 = vpop.f32.mrb[0].mxu0
        %395 = vdwg.mxu0
        %v396 = vld [vmem:[%s276] sm:$0xff]
        %v397 = vpack.c.bf16 %v396, %v396
        %398 = vrot.lane.b32.xlu0 %v348, 96
        %v399 = vpop.permute.xlu0 %398
        %400 = vrot.lane.b32.xlu0 %v349, 96
        %v401 = vpop.permute.xlu0 %400
        %404 = vrot.lane.b32.xlu0 %v338, 96
        %v405 = vpop.permute.xlu0 %404
        %v408 = vsel %vm352, %v397, 0
        %410 = vmatprep.subr.bf16.mxu0 0
        %411 = vmatpush1.bf16.msra.mxu0 %v399
        %412 = vmatprep.subr.bf16.mxu0 0
        %413 = vmatpush1.bf16.msra.mxu0 %v401
        %414 = vmatprep.subr.bf16.mxu0 0
        %415 = vmatpush1.bf16.msra.mxu0 0
        %416 = vmatprep.subr.bf16.mxu0 0
        %417 = vmatpush1.bf16.msra.mxu0 0
        %418 = vmatprep.subr.bf16.mxu0 0
        %419 = vmatpush1.bf16.msra.mxu0 0
        %420 = vmatprep.subr.bf16.mxu0 0
        %421 = vmatpush1.bf16.msra.mxu0 0
        %422 = vmatprep.subr.bf16.mxu0 0
        %423 = vmatpush1.bf16.msra.mxu0 0
        %424 = vmatprep.subr.bf16.mxu0 0
        %425 = vmatpush1.bf16.msra.mxu0 0
        %426 = vmatprep.subr.bf16.mxu0 0
        %427 = vmatpush1.bf16.msra.mxu0 0
        %428 = vmatprep.subr.bf16.mxu0 0
        %429 = vmatpush1.bf16.msra.mxu0 0
        %430 = vmatprep.subr.bf16.mxu0 0
        %431 = vmatpush1.bf16.msra.mxu0 0
        %432 = vmatprep.subr.bf16.mxu0 0
        %433 = vmatpush1.bf16.msra.mxu0 0
        %434 = vmatprep.subr.bf16.mxu0 0
        %435 = vmatpush1.bf16.msra.mxu0 0
        %436 = vmatprep.subr.bf16.mxu0 0
        %437 = vmatpush1.bf16.msra.mxu0 0
        %438 = vmatprep.subr.bf16.mxu0 0
        %439 = vmatpush1.bf16.msra.mxu0 0
        %440 = vmatprep.subr.bf16.mxu0 0
        %441 = vmatpush1.bf16.msra.mxu0 0
        %442 = vmatprep.mubr.bf16.mxu0 0
        %443 = vmatmul.mubr.bf16.gmra.mrb[0].mxu0 %v408
        %v444 = vpop.f32.mrb[0].mxu0
        %v445 = vadd.f32 %v405, %v444
        %v446 = vpop.f32.mrb[0].mxu0
        %v447 = vpop.f32.mrb[0].mxu0
        %v448 = vpop.f32.mrb[0].mxu0
        %449 = vdwg.mxu0
        %v450 = vld [vmem:[%s285] sm:$0xff]
        %v451 = vpack.c.bf16 %v450, %v450
        %452 = vrot.lane.b32.xlu0 %v348, 64
        %v453 = vpop.permute.xlu0 %452
        %454 = vrot.lane.b32.xlu0 %v349, 64
        %v455 = vpop.permute.xlu0 %454
        %458 = vrot.lane.b32.xlu0 %v338, 64
        %v459 = vpop.permute.xlu0 %458
        %v462 = vsel %vm352, %v451, 0
        %464 = vmatprep.subr.bf16.mxu0 0
        %465 = vmatpush1.bf16.msra.mxu0 %v453
        %466 = vmatprep.subr.bf16.mxu0 0
        %467 = vmatpush1.bf16.msra.mxu0 %v455
        %468 = vmatprep.subr.bf16.mxu0 0
        %469 = vmatpush1.bf16.msra.mxu0 0
        %470 = vmatprep.subr.bf16.mxu0 0
        %471 = vmatpush1.bf16.msra.mxu0 0
        %472 = vmatprep.subr.bf16.mxu0 0
        %473 = vmatpush1.bf16.msra.mxu0 0
        %474 = vmatprep.subr.bf16.mxu0 0
        %475 = vmatpush1.bf16.msra.mxu0 0
        %476 = vmatprep.subr.bf16.mxu0 0
        %477 = vmatpush1.bf16.msra.mxu0 0
        %478 = vmatprep.subr.bf16.mxu0 0
        %479 = vmatpush1.bf16.msra.mxu0 0
        %480 = vmatprep.subr.bf16.mxu0 0
        %481 = vmatpush1.bf16.msra.mxu0 0
        %482 = vmatprep.subr.bf16.mxu0 0
        %483 = vmatpush1.bf16.msra.mxu0 0
        %484 = vmatprep.subr.bf16.mxu0 0
        %485 = vmatpush1.bf16.msra.mxu0 0
        %486 = vmatprep.subr.bf16.mxu0 0
        %487 = vmatpush1.bf16.msra.mxu0 0
        %488 = vmatprep.subr.bf16.mxu0 0
        %489 = vmatpush1.bf16.msra.mxu0 0
        %490 = vmatprep.subr.bf16.mxu0 0
        %491 = vmatpush1.bf16.msra.mxu0 0
        %492 = vmatprep.subr.bf16.mxu0 0
        %493 = vmatpush1.bf16.msra.mxu0 0
        %494 = vmatprep.subr.bf16.mxu0 0
        %495 = vmatpush1.bf16.msra.mxu0 0
        %496 = vmatprep.mubr.bf16.mxu0 0
        %497 = vmatmul.mubr.bf16.gmra.mrb[0].mxu0 %v462
        %v498 = vpop.f32.mrb[0].mxu0
        %v499 = vadd.f32 %v459, %v498
        %v500 = vpop.f32.mrb[0].mxu0
        %v501 = vpop.f32.mrb[0].mxu0
        %v502 = vpop.f32.mrb[0].mxu0
        %503 = vdwg.mxu0
        %v504 = vmul.f32 %v391, 0.35355338
        %v505 = vmul.f32 %v504, %v445
        %vm506 = vcmask 64512
        %v507 = vsel %vm506, %v505, 0.0
        %508 = vadd.xlane.f32.xlu0 %v507
        %v509 = vpop.xlane.xlu0 %508
        %511 = vrot.lane.b32.xlu0 %v445, 120
        %v512 = vpop.permute.xlu0 %511
        %v514 = vmul.f32 %v504, %v512
        %v515 = vsel %vm506, %v514, 0.0
        %516 = vadd.xlane.f32.xlu0 %v515
        %v517 = vpop.xlane.xlu0 %516
        %518 = vrot.lane.b32.xlu0 %v445, 112
        %v519 = vpop.permute.xlu0 %518
        %v521 = vmul.f32 %v504, %v519
        %v522 = vsel %vm506, %v521, 0.0
        %523 = vadd.xlane.f32.xlu0 %v522
        %v524 = vpop.xlane.xlu0 %523
        %525 = vrot.lane.b32.xlu0 %v445, 104
        %v526 = vpop.permute.xlu0 %525
        %v528 = vmul.f32 %v504, %v526
        %v529 = vsel %vm506, %v528, 0.0
        %530 = vadd.xlane.f32.xlu0 %v529
        %v531 = vpop.xlane.xlu0 %530
        %vm532 = vcmask 7168
        %v533 = vsel %vm532, %v509, %v517
        %vm534 = vcmask 15360
        %v535 = vsel %vm534, %v533, %v524
        %vm536 = vcmask 23552
        %v537 = vsel %vm536, %v535, %v531
        %vm538 = vcmask 31744
        %v539 = vsel %vm538, %v537, -inf
        %540 = vmax.xlane.f32.xlu0 %v539
        %v541 = vpop.xlane.xlu0 %540
        %v542 = vsub.f32 %v537, %v541
        %v543 = vmul.f32 %v542, 1.442695
        %v544 = vpow.pop %v543
        %v545 = vsel %vm538, %v544, 0.0
        %546 = vadd.xlane.f32.xlu0 %v545
        %v547 = vpop.xlane.xlu0 %546
        %v548 = vrcp.pop %v547
        %v549 = vmul.f32 %v544, %v548
        %551 = vset.pattern.permute.xlu0 0
        %552 = vperm.xlu0 %551, %v549
        %v553 = vpop.permute.xlu0 %552
        %v555 = vmul.f32 %v553, %v499
        %556 = vset.pattern.permute.xlu0 1
        %557 = vperm.xlu0 %556, %v549
        %v558 = vpop.permute.xlu0 %557
        %v560 = vmul.f32 %v558, %v499
        %562 = vrot.lane.b32.xlu0 %v560, 120
        %v563 = vpop.permute.xlu0 %562
        %v565 = vadd.f32 %v555, %v563
        %566 = vset.pattern.permute.xlu0 2
        %567 = vperm.xlu0 %566, %v549
        %v568 = vpop.permute.xlu0 %567
        %v570 = vmul.f32 %v568, %v499
        %572 = vrot.lane.b32.xlu0 %v570, 112
        %v573 = vpop.permute.xlu0 %572
        %v575 = vadd.f32 %v565, %v573
        %576 = vset.pattern.permute.xlu0 3
        %577 = vperm.xlu0 %576, %v549
        %v578 = vpop.permute.xlu0 %577
        %v580 = vmul.f32 %v578, %v499
        %582 = vrot.lane.b32.xlu0 %v580, 104
        %v583 = vpop.permute.xlu0 %582
        %v585 = vadd.f32 %v575, %v583
        %586 = vrot.lane.b32.xlu0 %v445, 8
        %v587 = vpop.permute.xlu0 %586
        %v589 = vmul.f32 %v504, %v587
        %591 = vrot.lane.b32.xlu0 %v589, 120
        %v592 = vpop.permute.xlu0 %591
        %v594 = vsel %vm506, %v592, 0.0
        %595 = vadd.xlane.f32.xlu0 %v594
        %v596 = vpop.xlane.xlu0 %595
        %598 = vrot.lane.b32.xlu0 %v505, 120
        %v599 = vpop.permute.xlu0 %598
        %v601 = vsel %vm506, %v599, 0.0
        %602 = vadd.xlane.f32.xlu0 %v601
        %v603 = vpop.xlane.xlu0 %602
        %605 = vrot.lane.b32.xlu0 %v514, 120
        %v606 = vpop.permute.xlu0 %605
        %v608 = vsel %vm506, %v606, 0.0
        %609 = vadd.xlane.f32.xlu0 %v608
        %v610 = vpop.xlane.xlu0 %609
        %612 = vrot.lane.b32.xlu0 %v521, 120
        %v613 = vpop.permute.xlu0 %612
        %v615 = vsel %vm506, %v613, 0.0
        %616 = vadd.xlane.f32.xlu0 %v615
        %v617 = vpop.xlane.xlu0 %616
        %v618 = vsel %vm532, %v596, %v603
        %v619 = vsel %vm534, %v618, %v610
        %v620 = vsel %vm536, %v619, %v617
        %v621 = vsel %vm538, %v620, -inf
        %622 = vmax.xlane.f32.xlu0 %v621
        %v623 = vpop.xlane.xlu0 %622
        %v624 = vsub.f32 %v620, %v623
        %v625 = vmul.f32 %v624, 1.442695
        %v626 = vpow.pop %v625
        %v627 = vsel %vm538, %v626, 0.0
        %628 = vadd.xlane.f32.xlu0 %v627
        %v629 = vpop.xlane.xlu0 %628
        %v630 = vrcp.pop %v629
        %v631 = vmul.f32 %v626, %v630
        %633 = vset.pattern.permute.xlu0 0
        %634 = vperm.xlu0 %633, %v631
        %v635 = vpop.permute.xlu0 %634
        %v637 = vmul.f32 %v635, %v499
        %638 = vset.pattern.permute.xlu0 1
        %639 = vperm.xlu0 %638, %v631
        %v640 = vpop.permute.xlu0 %639
        %v642 = vmul.f32 %v640, %v499
        %644 = vrot.lane.b32.xlu0 %v642, 120
        %v645 = vpop.permute.xlu0 %644
        %v647 = vadd.f32 %v637, %v645
        %648 = vset.pattern.permute.xlu0 2
        %649 = vperm.xlu0 %648, %v631
        %v650 = vpop.permute.xlu0 %649
        %v652 = vmul.f32 %v650, %v499
        %654 = vrot.lane.b32.xlu0 %v652, 112
        %v655 = vpop.permute.xlu0 %654
        %v657 = vadd.f32 %v647, %v655
        %658 = vset.pattern.permute.xlu0 3
        %659 = vperm.xlu0 %658, %v631
        %v660 = vpop.permute.xlu0 %659
        %v662 = vmul.f32 %v660, %v499
        %664 = vrot.lane.b32.xlu0 %v662, 104
        %v665 = vpop.permute.xlu0 %664
        %v667 = vadd.f32 %v657, %v665
        %668 = vrot.lane.b32.xlu0 %v445, 16
        %v669 = vpop.permute.xlu0 %668
        %v671 = vmul.f32 %v504, %v669
        %673 = vrot.lane.b32.xlu0 %v671, 112
        %v674 = vpop.permute.xlu0 %673
        %v676 = vsel %vm506, %v674, 0.0
        %677 = vadd.xlane.f32.xlu0 %v676
        %v678 = vpop.xlane.xlu0 %677
        %679 = vrot.lane.b32.xlu0 %v589, 112
        %v680 = vpop.permute.xlu0 %679
        %v682 = vsel %vm506, %v680, 0.0
        %683 = vadd.xlane.f32.xlu0 %v682
        %v684 = vpop.xlane.xlu0 %683
        %685 = vrot.lane.b32.xlu0 %v505, 112
        %v686 = vpop.permute.xlu0 %685
        %v688 = vsel %vm506, %v686, 0.0
        %689 = vadd.xlane.f32.xlu0 %v688
        %v690 = vpop.xlane.xlu0 %689
        %691 = vrot.lane.b32.xlu0 %v514, 112
        %v692 = vpop.permute.xlu0 %691
        %v694 = vsel %vm506, %v692, 0.0
        %695 = vadd.xlane.f32.xlu0 %v694
        %v696 = vpop.xlane.xlu0 %695
        %v697 = vsel %vm532, %v678, %v684
        %v698 = vsel %vm534, %v697, %v690
        %v699 = vsel %vm536, %v698, %v696
        %v700 = vsel %vm538, %v699, -inf
        %701 = vmax.xlane.f32.xlu0 %v700
        %v702 = vpop.xlane.xlu0 %701
        %v703 = vsub.f32 %v699, %v702
        %v704 = vmul.f32 %v703, 1.442695
        %v705 = vpow.pop %v704
        %v706 = vsel %vm538, %v705, 0.0
        %707 = vadd.xlane.f32.xlu0 %v706
        %v708 = vpop.xlane.xlu0 %707
        %v709 = vrcp.pop %v708
        %v710 = vmul.f32 %v705, %v709
        %712 = vset.pattern.permute.xlu0 0
        %713 = vperm.xlu0 %712, %v710
        %v714 = vpop.permute.xlu0 %713
        %v716 = vmul.f32 %v714, %v499
        %717 = vset.pattern.permute.xlu0 1
        %718 = vperm.xlu0 %717, %v710
        %v719 = vpop.permute.xlu0 %718
        %v721 = vmul.f32 %v719, %v499
        %723 = vrot.lane.b32.xlu0 %v721, 120
        %v724 = vpop.permute.xlu0 %723
        %v726 = vadd.f32 %v716, %v724
        %727 = vset.pattern.permute.xlu0 2
        %728 = vperm.xlu0 %727, %v710
        %v729 = vpop.permute.xlu0 %728
        %v731 = vmul.f32 %v729, %v499
        %733 = vrot.lane.b32.xlu0 %v731, 112
        %v734 = vpop.permute.xlu0 %733
        %v736 = vadd.f32 %v726, %v734
        %737 = vset.pattern.permute.xlu0 3
        %738 = vperm.xlu0 %737, %v710
        %v739 = vpop.permute.xlu0 %738
        %v741 = vmul.f32 %v739, %v499
        %743 = vrot.lane.b32.xlu0 %v741, 104
        %v744 = vpop.permute.xlu0 %743
        %v746 = vadd.f32 %v736, %v744
        %747 = vrot.lane.b32.xlu0 %v445, 24
        %v748 = vpop.permute.xlu0 %747
        %v750 = vmul.f32 %v504, %v748
        %752 = vrot.lane.b32.xlu0 %v750, 104
        %v753 = vpop.permute.xlu0 %752
        %v755 = vsel %vm506, %v753, 0.0
        %756 = vadd.xlane.f32.xlu0 %v755
        %v757 = vpop.xlane.xlu0 %756
        %758 = vrot.lane.b32.xlu0 %v671, 104
        %v759 = vpop.permute.xlu0 %758
        %v761 = vsel %vm506, %v759, 0.0
        %762 = vadd.xlane.f32.xlu0 %v761
        %v763 = vpop.xlane.xlu0 %762
        %764 = vrot.lane.b32.xlu0 %v589, 104
        %v765 = vpop.permute.xlu0 %764
        %v767 = vsel %vm506, %v765, 0.0
        %768 = vadd.xlane.f32.xlu0 %v767
        %v769 = vpop.xlane.xlu0 %768
        %770 = vrot.lane.b32.xlu0 %v505, 104
        %v771 = vpop.permute.xlu0 %770
        %v773 = vsel %vm506, %v771, 0.0
        %774 = vadd.xlane.f32.xlu0 %v773
        %v775 = vpop.xlane.xlu0 %774
        %v776 = vsel %vm532, %v757, %v763
        %v777 = vsel %vm534, %v776, %v769
        %v778 = vsel %vm536, %v777, %v775
        %v779 = vsel %vm538, %v778, -inf
        %780 = vmax.xlane.f32.xlu0 %v779
        %v781 = vpop.xlane.xlu0 %780
        %v782 = vsub.f32 %v778, %v781
        %v783 = vmul.f32 %v782, 1.442695
        %v784 = vpow.pop %v783
        %v785 = vsel %vm538, %v784, 0.0
        %786 = vadd.xlane.f32.xlu0 %v785
        %v787 = vpop.xlane.xlu0 %786
        %v788 = vrcp.pop %v787
        %v789 = vmul.f32 %v784, %v788
        %791 = vset.pattern.permute.xlu0 0
        %792 = vperm.xlu0 %791, %v789
        %v793 = vpop.permute.xlu0 %792
        %v795 = vmul.f32 %v793, %v499
        %796 = vset.pattern.permute.xlu0 1
        %797 = vperm.xlu0 %796, %v789
        %v798 = vpop.permute.xlu0 %797
        %v800 = vmul.f32 %v798, %v499
        %802 = vrot.lane.b32.xlu0 %v800, 120
        %v803 = vpop.permute.xlu0 %802
        %v805 = vadd.f32 %v795, %v803
        %806 = vset.pattern.permute.xlu0 2
        %807 = vperm.xlu0 %806, %v789
        %v808 = vpop.permute.xlu0 %807
        %v810 = vmul.f32 %v808, %v499
        %812 = vrot.lane.b32.xlu0 %v810, 112
        %v813 = vpop.permute.xlu0 %812
        %v815 = vadd.f32 %v805, %v813
        %816 = vset.pattern.permute.xlu0 3
        %817 = vperm.xlu0 %816, %v789
        %v818 = vpop.permute.xlu0 %817
        %v820 = vmul.f32 %v818, %v499
        %822 = vrot.lane.b32.xlu0 %v820, 104
        %v823 = vpop.permute.xlu0 %822
        %v825 = vadd.f32 %v815, %v823
        %827 = vrot.lane.b32.xlu0 %v667, 8
        %v828 = vpop.permute.xlu0 %827
        %831 = vrot.lane.b32.xlu0 %v746, 16
        %v832 = vpop.permute.xlu0 %831
        %835 = vrot.lane.b32.xlu0 %v825, 24
        %v836 = vpop.permute.xlu0 %835
        %v838 = vsel %vm506, %v585, %v828
        %vm839 = vcmask 130048
        %v840 = vsel %vm839, %v838, %v832
        %vm841 = vcmask 195584
        %v842 = vsel %vm841, %v840, %v836
        %843 = vst.msk [vmem:[%s325] sm:$0xff] %vm352, %v842
        %s844 = sand.u32 %s154, 1
        %s845 = scalar_lea.sflag [#allocation4], %s844
        %s846 = sand.u32 %s154, 1
        %s847 = smul.addr %s846, 8
        %s848 = scalar_lea.vmem [#allocation10], %s847
        // Predicated region
        $region57: #{tpu_custom_call.1} parent=39 // pred_check
          %p849 = pneg %p164
        $region58: #{tpu_custom_call.1} parent=39 // pred_check_branch
          %851 = sbr.rel (%p849) target = $region60
        $region59: #{tpu_custom_call.1} parent=39 // pred_region
          %s853 = ssub.s32 128, 128
          %854 = vsyncadd %s845, %s853
          %s855 = smul.addr %s26, 128
          %s856 = scalar_lea.hbm %s5, %s855
          %s858 = sshll.u32 %s848, 4
          %s859 = int_to_ptr.vmem [resolvable:$true] %s858
          %861 = dma.vmem_to_hbm [thread:$0]  %s859, 128, %s856, %s845
        $region60: #{tpu_custom_call.1} parent=39 // pred_fallthru
          _
      $region40: #{tpu_custom_call.1} parent=5 // pred_fallthru
        _
      %p862 = scmp.le.s32.totalorder 2, %s21
      // Predicated region
      $region61: #{tpu_custom_call.1} parent=5 // pred_check
        %p863 = pneg %p862
      $region62: #{tpu_custom_call.1} parent=5 // pred_check_branch
        %865 = sbr.rel (%p863) target = $region64
      $region63: #{tpu_custom_call.1} parent=5 // pred_region
        %s866 = ssub.s32 %s21, 2
        // Predicated region
        $region65: #{tpu_custom_call.1} parent=63 // pred_check
          %p867 = pneg %p170
        $region66: #{tpu_custom_call.1} parent=63 // pred_check_branch
          %869 = sbr.rel (%p867) target = $region68
        $region67: #{tpu_custom_call.1} parent=63 // pred_region
          %s870 = sand.u32 %s155, 1
          %s871 = scalar_lea.sflag [#allocation4], %s870
          %s872 = sand.u32 %s155, 1
          %s873 = smul.addr %s872, 8
          %s874 = scalar_lea.vmem [#allocation10], %s873
          %875 = dma.done %s871, 128
        $region68: #{tpu_custom_call.1} parent=63 // pred_fallthru
          _
      $region64: #{tpu_custom_call.1} parent=5 // pred_fallthru
        _
    $region6: #{tpu_custom_call.1} parent=1 // loop_footer
      %s25 = sadd.s32 1, %s21
    $region7: #{tpu_custom_call.1} parent=1 // loop_footer_branch
      %20 = sbr.rel target = $region3
    $region8: #{tpu_custom_call.1} parent=1 // loop_exit
      _
    %876 = vsyncpa [#allocation3], 1
    %s877 = scalar_lea.sflag [#allocation3], 1
    %878 = vsyncpa %s877, 1
    %879 = vsyncpa [#allocation6], 1
    %s880 = scalar_lea.sflag [#allocation6], 1
    %881 = vsyncpa %s880, 1
    %882 = vsyncpa [#allocation9], 1
    %883 = vsyncpa [#allocation4], 1
    %s884 = scalar_lea.sflag [#allocation4], 1
    %885 = vsyncpa %s884, 1

</llo_original>
